<compile_context>
chip_gen: v7x
topology: tpu7x:2x2x1
jax: 0.10.0
libtpu: 0.0.40
codegen_flags: <defaults>
</compile_context>

<pallas_src>
import jax
import jax.numpy as jnp
from jax.experimental import pallas as pl
from jax.experimental.pallas import tpu as pltpu


def _h_sigmoid_kernel(x_ref, o_ref):
    x = x_ref[...]
    # relu6(x + 3) / 6 == clamp(x + 3, 0, 6) * (1/6)  -- pure VPU, stays in input dtype
    y = jnp.minimum(jnp.maximum(x + 3.0, 0.0), 6.0) * (1.0 / 6.0)
    o_ref[...] = y.astype(o_ref.dtype)


_LANE = 128
# ~2 MiB per block: with input + output each double-buffered this is ~8 MiB of
# VMEM, safely inside v5e's 16 MiB default scoped VMEM (and v6e/v7x limits).
_TARGET_BLOCK_BYTES = 2 * 1024 * 1024


def h_sigmoid(x: jax.Array) -> jax.Array:
    """Elementwise hard-sigmoid matching torch ReLU6(x + 3) / 6 semantics."""
    orig_shape = x.shape
    orig_dtype = x.dtype
    total = x.size
    itemsize = jnp.dtype(orig_dtype).itemsize

    x_flat = jnp.ravel(x)

    # Minimal padding: only up to a multiple of 128 lanes (not a full tile).
    padded_total = ((total + _LANE - 1) // _LANE) * _LANE
    needs_pad = padded_total != total
    if needs_pad:
        x_flat = jnp.pad(x_flat, (0, padded_total - total))

    # Pick the widest lane dimension (multiple of 128) that divides the flat
    # length -> long unmasked vst runs / large DMA descriptors.
    width = _LANE
    for cand in (4096, 2048, 1024, 512, 256):
        if padded_total % cand == 0:
            width = cand
            break

    rows = padded_total // width
    x2d = x_flat.reshape(rows, width)

    # ~2 MiB blocks; sublane (row) block is a multiple of 8, or the full row
    # count for small inputs (both satisfy the (8,128) block constraint).
    block_rows = max(8, (_TARGET_BLOCK_BYTES // (width * itemsize)) // 8 * 8)
    if block_rows >= rows:
        block_rows = rows

    grid = (pl.cdiv(rows, block_rows),)

    out2d = pl.pallas_call(
        _h_sigmoid_kernel,
        out_shape=jax.ShapeDtypeStruct((rows, width), orig_dtype),
        grid_spec=pltpu.PrefetchScalarGridSpec(
            num_scalar_prefetch=0,
            grid=grid,
            in_specs=[pl.BlockSpec((block_rows, width), lambda i: (i, 0))],
            out_specs=pl.BlockSpec((block_rows, width), lambda i: (i, 0)),
        ),
        compiler_params=pltpu.CompilerParams(
            dimension_semantics=("parallel",),
        ),
    )(x2d)

    out_flat = out2d.reshape(-1)
    if needs_pad:
        out_flat = out_flat[:total]
    return out_flat.reshape(orig_shape)


def _h_sigmoid_ref(x):
    return jnp.clip(x.astype(jnp.float32) + 3.0, 0.0, 6.0) / 6.0


if __name__ == "__main__":
    key = jax.random.PRNGKey(0)
    k0, k1, k2 = jax.random.split(key, 3)

    # Primary check: NCHW f32 input, as the PyTorch conv blocks would feed it.
    x = jax.random.normal(k0, (2, 4, 16, 16), dtype=jnp.float32) * 4.0
    y = jax.block_until_ready(h_sigmoid(x))
    assert y.shape == x.shape and y.dtype == x.dtype
    assert jnp.allclose(y, _h_sigmoid_ref(x), atol=1e-6), "f32 mismatch vs reference"

    # Non-128-aligned shape exercises the minimal-pad path.
    x_odd = jax.random.normal(k1, (3, 5, 7, 9), dtype=jnp.float32) * 4.0
    y_odd = jax.block_until_ready(h_sigmoid(x_odd))
    assert y_odd.shape == x_odd.shape and y_odd.dtype == x_odd.dtype
    assert jnp.allclose(y_odd, _h_sigmoid_ref(x_odd), atol=1e-6), "odd-shape mismatch"

    # bf16 stays bf16 end-to-end (halves HBM traffic for this memory-bound op).
    x_bf16 = (jax.random.normal(k2, (2, 4, 16, 16), dtype=jnp.float32) * 4.0).astype(jnp.bfloat16)
    y_bf16 = jax.block_until_ready(h_sigmoid(x_bf16))
    assert y_bf16.shape == x_bf16.shape and y_bf16.dtype == jnp.bfloat16
    assert jnp.allclose(y_bf16.astype(jnp.float32), _h_sigmoid_ref(x_bf16), atol=5e-2), "bf16 mismatch"

    print("KERNEL_OK")
</pallas_src>

<mosaic_0001>
module attributes {stable_mosaic.version = 11 : i64} {
  func.func @_h_sigmoid_kernel(%arg0: i32, %arg1: memref<1x2048xf32, #tpu.memory_space<vmem>>, %arg2: memref<1x2048xf32, #tpu.memory_space<vmem>>) attributes {dimension_semantics = [#tpu.dimension_semantics<parallel>], iteration_bounds = array<i64: 1>, scalar_prefetch = 0 : i64, scratch_operands = 0 : i64, tpu.core_type = #tpu.core_type<tc>, window_params = [{transform_indices = @transform_0, window_bounds = array<i64: 1, 2048>}, {transform_indices = @transform_1, window_bounds = array<i64: 1, 2048>}]} {
    %c0 = arith.constant 0 : index
    %c0_0 = arith.constant 0 : index
    %0 = vector.load %arg1[%c0, %c0_0] : memref<1x2048xf32, #tpu.memory_space<vmem>>, vector<1x2048xf32>
    %cst = arith.constant 3.000000e+00 : f32
    %1 = vector.broadcast %cst : f32 to vector<1x2048xf32>
    %2 = arith.addf %0, %1 : vector<1x2048xf32>
    %cst_1 = arith.constant 0.000000e+00 : f32
    %3 = vector.broadcast %cst_1 : f32 to vector<1x2048xf32>
    %4 = arith.maximumf %2, %3 : vector<1x2048xf32>
    %cst_2 = arith.constant 6.000000e+00 : f32
    %5 = vector.broadcast %cst_2 : f32 to vector<1x2048xf32>
    %6 = arith.minimumf %4, %5 : vector<1x2048xf32>
    %cst_3 = arith.constant 0.166666672 : f32
    %7 = vector.broadcast %cst_3 : f32 to vector<1x2048xf32>
    %8 = arith.mulf %6, %7 : vector<1x2048xf32>
    %c0_4 = arith.constant 0 : index
    %c0_5 = arith.constant 0 : index
    %9 = vector.load %arg2[%c0_4, %c0_5] : memref<1x2048xf32, #tpu.memory_space<vmem>>, vector<1x2048xf32>
    tpu.vector_store %arg2[%c0_4, %c0_5], %8 {strides = array<i32>} : memref<1x2048xf32, #tpu.memory_space<vmem>>, vector<1x2048xf32>,
    return
  }
  func.func @transform_0(%arg0: i32) -> (i32, i32) {
    %c0_i32 = arith.constant 0 : i32
    %c0_i32_0 = arith.constant 0 : i32
    return %arg0, %c0_i32 : i32, i32
  }
  func.func @transform_1(%arg0: i32) -> (i32, i32) {
    %c0_i32 = arith.constant 0 : i32
    %c0_i32_0 = arith.constant 0 : i32
    return %arg0, %c0_i32 : i32, i32
  }
}

</mosaic_0001>

<llo_original>
// kernel: tpu_custom_call.1
$region0: #{tpu_custom_call.1}
  #allocation0 [shape = 'u32[]', space=smem, size = 0x4, offset = 0x4, fixed_abs, tag = 'smem constant byte address 0x4 - core index']
  #allocation1 [shape = 'u32[144,128]{1,0:T(1,128)}', space=vmem, size = 0x12000, scoped, tag = 'internal scratch']
  %s0 = inlined_call_operand.hbm [shape: f32[1,2048], index: 0, kind: input, shape index: {}]
  %s1 = inlined_call_operand.hbm [shape: f32[1,2048], index: 1, kind: output, shape index: {}]
  %s2 = sld [smem:[#allocation0]]
  $region18: #{tpu_custom_call.1} parent=0
    _
  %s4 = ssub.s32 1, %s2
  %s5 = scalar_select 0, %s4, %s2
  $region1: #{tpu_custom_call.1} parent=0
    #allocation2 [shape = 'u8[8192]{0}', space=vmem, size = 0x2000, scoped, tag = 'input window, operand 0, single buffered']
    #allocation3 [shape = 's32[1]{0}', space=sflag, size = 0x4, scoped, tag = 'scoped memory for tpu_custom_call.1']
    #allocation4 [shape = 's32[1]{0}', space=sflag, size = 0x4, scoped, tag = 'scoped memory for tpu_custom_call.1']
    #allocation5 [shape = 'u8[8192]{0}', space=vmem, size = 0x2000, scoped, tag = 'output window, operand 0, single buffered']
    %6 = vsyncpa [#allocation3], 0
    %7 = vsyncpa [#allocation4], 0
    // Predicated region
    $region2: #{tpu_custom_call.1} parent=1 // pred_check
      _
    $region3: #{tpu_custom_call.1} parent=1 // pred_check_branch
      %9 = sbr.rel (0) target = $region5
    $region4: #{tpu_custom_call.1} parent=1 // pred_region
      %s11 = ssub.s32 256, 256
      %12 = vsyncadd [#allocation3], %s11
      %s14 = sshll.u32 [#allocation2], 4
      %s15 = int_to_ptr.vmem [resolvable:$true] %s14
      %17 = dma.hbm_to_vmem [thread:$0]  %s0, 256, %s15, [#allocation3]
    $region5: #{tpu_custom_call.1} parent=1 // pred_fallthru
      _
    // Predicated region
    $region6: #{tpu_custom_call.1} parent=1 // pred_check
      _
    $region7: #{tpu_custom_call.1} parent=1 // pred_check_branch
      %19 = sbr.rel (0) target = $region9
    $region8: #{tpu_custom_call.1} parent=1 // pred_region
      %20 = dma.done [#allocation3], 256
    $region9: #{tpu_custom_call.1} parent=1 // pred_fallthru
      _
    %v21 = vld [vmem:[#allocation2] sm:$0xff]
    %v22 = vld [vmem:[#allocation2 + $0x8] sm:$0xff]
    %v23 = vadd.f32 %v21, 3.0
    %v24 = vadd.f32 %v22, 3.0
    %v25 = vmax.f32 %v23, 0.0
    %v26 = vmax.f32 %v24, 0.0
    %v27 = vmin.f32 %v25, 6.0
    %v28 = vmin.f32 %v26, 6.0
    %v29 = vmul.f32 %v27, 0.16666667
    %v30 = vmul.f32 %v28, 0.16666667
    %31 = vst [vmem:[#allocation5] sm:$0xff] %v29
    %32 = vst [vmem:[#allocation5 + $0x8] sm:$0xff] %v30
    // Predicated region
    $region10: #{tpu_custom_call.1} parent=1 // pred_check
      _
    $region11: #{tpu_custom_call.1} parent=1 // pred_check_branch
      %34 = sbr.rel (0) target = $region13
    $region12: #{tpu_custom_call.1} parent=1 // pred_region
      %s36 = ssub.s32 256, 256
      %37 = vsyncadd [#allocation4], %s36
      %s39 = sshll.u32 [#allocation5], 4
      %s40 = int_to_ptr.vmem [resolvable:$true] %s39
      %42 = dma.vmem_to_hbm [thread:$0]  %s40, 256, %s1, [#allocation4]
    $region13: #{tpu_custom_call.1} parent=1 // pred_fallthru
      _
    // Predicated region
    $region14: #{tpu_custom_call.1} parent=1 // pred_check
      _
    $region15: #{tpu_custom_call.1} parent=1 // pred_check_branch
      %44 = sbr.rel (0) target = $region17
    $region16: #{tpu_custom_call.1} parent=1 // pred_region
      %45 = dma.done [#allocation4], 256
    $region17: #{tpu_custom_call.1} parent=1 // pred_fallthru
      _
    %46 = vsyncpa [#allocation3], 1
    %47 = vsyncpa [#allocation4], 1

</llo_original>
